<compile_context>
chip_gen: v7x
topology: tpu7x:2x2x1
jax: 0.10.0
libtpu: 0.0.40
codegen_flags: <defaults>
</compile_context>

<pallas_src>
import jax
import jax.numpy as jnp
from jax.experimental import pallas as pl
from jax.experimental.pallas import tpu as pltpu

LN_EPS = 1e-5  # nn.LayerNorm default


def _round_up(a, b):
    return (a + b - 1) // b * b


def _pick_tile(hw, tm_max):
    """Choose the spatial tile TM (lane dim of every block) and padded HW.

    Preference: (1) the whole image if it fits (zero padding, biggest tile);
    (2) a multiple of 128 <= tm_max minimizing padding, ties broken by larger TM.
    """
    if hw <= tm_max:
        return hw, hw
    best_key, best_t, best_pad = None, 128, _round_up(hw, 128)
    t = 128
    while t <= tm_max:
        hw_pad = _round_up(hw, t)
        key = (hw_pad - hw, -t)
        if best_key is None or key < best_key:
            best_key, best_t, best_pad = key, t, hw_pad
        t += 128
    return best_t, best_pad


def stem_kernel(x_ref, w_ref, p_ref, o_ref):
    # x_ref: (1, K, TM)  im2col'd input columns for one spatial tile of one image
    # w_ref: (E, K)      resident flattened conv weight
    # p_ref: (E, 3)      resident [bias | gamma | beta] columns
    # o_ref: (1, E, TM)  lane-dense output block
    x = x_ref[0]                                                        # (K, TM)
    acc = jnp.dot(w_ref[...], x, preferred_element_type=jnp.float32)   # (E, TM) MXU, f32 acc

    bias = p_ref[:, 0:1].astype(jnp.float32)                           # (E, 1)
    gamma = p_ref[:, 1:2].astype(jnp.float32)
    beta = p_ref[:, 2:3].astype(jnp.float32)

    acc = acc + bias                                                    # conv bias

    # Fused LayerNorm over the embedding (sublane) axis; biased variance like nn.LayerNorm.
    mean = jnp.mean(acc, axis=0, keepdims=True)                         # (1, TM)
    xc = acc - mean
    var = jnp.mean(xc * xc, axis=0, keepdims=True)
    inv = jax.lax.rsqrt(var + LN_EPS)
    y = xc * inv * gamma + beta

    o_ref[0] = y.astype(o_ref.dtype)


def stem_forward(x_nchw, weight_oihw, bias, gamma, beta, *,
                 patch_size=4, stride=4, tm_max=2048, compute_dtype=None):
    """x_nchw: (B, Cin, H, W); weight_oihw: (E, Cin, P, P); bias/gamma/beta: (E,)."""
    assert patch_size == stride, "Stem uses kernel_size == stride (non-overlapping patches)"
    B, Cin, H, W = x_nchw.shape
    E = weight_oihw.shape[0]
    P = patch_size
    assert H % P == 0 and W % P == 0, "spatial dims must be divisible by patch_size"
    Ho, Wo = H // P, W // P
    HW = Ho * Wo
    K = Cin * P * P

    out_dtype = x_nchw.dtype if compute_dtype is None else compute_dtype
    if compute_dtype is not None:
        x_nchw = x_nchw.astype(compute_dtype)
        weight_oihw = weight_oihw.astype(compute_dtype)

    # im2col with the contraction dim leading: (B, K, HW); k ordered (c, kh, kw)
    # to match the OIHW weight flattening.  K-major means the kernel's output block
    # is (E, TM) directly: no output transpose anywhere, final NCHW reshape is free.
    xp = x_nchw.reshape(B, Cin, Ho, P, Wo, P)
    xp = jnp.transpose(xp, (0, 1, 3, 5, 2, 4))           # (B, Cin, P, P, Ho, Wo)
    x3d = xp.reshape(B, K, HW)

    w2d = weight_oihw.reshape(E, K)                       # (E, K), no transpose needed
    params = jnp.stack([bias, gamma, beta], axis=1)       # (E, 3)

    TM, HW_pad = _pick_tile(HW, tm_max)
    if HW_pad != HW:
        # Rare fallback (no multiple-of-128 tile divides HW); pad is < TM columns.
        x3d = jnp.pad(x3d, ((0, 0), (0, 0), (0, HW_pad - HW)))
    n_t = HW_pad // TM
    grid = (B, n_t)

    out3d = pl.pallas_call(
        stem_kernel,
        out_shape=jax.ShapeDtypeStruct((B, E, HW_pad), out_dtype),
        grid=grid,
        in_specs=[
            pl.BlockSpec((1, K, TM), lambda b, i: (b, 0, i)),
            pl.BlockSpec((E, K), lambda b, i: (0, 0)),    # constant index_map -> VMEM resident
            pl.BlockSpec((E, 3), lambda b, i: (0, 0)),    # constant index_map -> VMEM resident
        ],
        out_specs=pl.BlockSpec((1, E, TM), lambda b, i: (b, 0, i)),
        compiler_params=pltpu.CompilerParams(
            dimension_semantics=("parallel", "parallel"),
            vmem_limit_bytes=32 * 1024 * 1024,
        ),
    )(x3d, w2d, params)

    if HW_pad != HW:
        out3d = out3d[:, :, :HW]
    return out3d.reshape(B, E, Ho, Wo)                    # NCHW, metadata-only reshape


def reference(x_nchw, weight_oihw, bias, gamma, beta, *, stride=4):
    out = jax.lax.conv_general_dilated(
        x_nchw, weight_oihw, window_strides=(stride, stride), padding="VALID",
        dimension_numbers=("NCHW", "OIHW", "NCHW"))
    out = out + bias.reshape(1, -1, 1, 1)
    out = jnp.transpose(out, (0, 2, 3, 1))                # b c h w -> b h w c
    mean = out.mean(-1, keepdims=True)
    var = ((out - mean) ** 2).mean(-1, keepdims=True)
    out = (out - mean) / jnp.sqrt(var + LN_EPS) * gamma + beta
    return jnp.transpose(out, (0, 3, 1, 2))               # b h w c -> b c h w


if __name__ == "__main__":
    key = jax.random.PRNGKey(0)
    k_x, k_w, k_b = jax.random.split(key, 3)

    # Module defaults: in_channels=3, patch_size=stride=4, embed_dim=96.
    B, Cin, H, W = 2, 3, 16, 16
    P = 4
    E = 96

    x = jax.random.normal(k_x, (B, Cin, H, W), jnp.float32)

    fan_in = Cin * P * P
    bound = 1.0 / (fan_in ** 0.5)
    weight = jax.random.uniform(k_w, (E, Cin, P, P), jnp.float32,
                                minval=-bound, maxval=bound)
    bias = jax.random.uniform(k_b, (E,), jnp.float32, minval=-bound, maxval=bound)
    gamma = jnp.ones((E,), jnp.float32)     # nn.LayerNorm default affine init
    beta = jnp.zeros((E,), jnp.float32)

    out = stem_forward(x, weight, bias, gamma, beta, patch_size=P, stride=P)
    out = jax.block_until_ready(out)

    ref = reference(x, weight, bias, gamma, beta, stride=P)
    assert out.shape == (B, E, H // P, W // P), out.shape
    err = float(jnp.max(jnp.abs(out - ref)))
    assert jnp.allclose(out, ref, atol=1e-4, rtol=1e-4), f"mismatch vs reference, max err={err}"

    print("KERNEL_OK")
</pallas_src>

<mosaic_0001>
module attributes {stable_mosaic.version = 11 : i64} {
  func.func @stem_kernel(%arg0: i32, %arg1: i32, %arg2: memref<1x48x16xf32, #tpu.memory_space<vmem>>, %arg3: memref<96x48xf32, #tpu.memory_space<vmem>>, %arg4: memref<96x3xf32, #tpu.memory_space<vmem>>, %arg5: memref<1x96x16xf32, #tpu.memory_space<vmem>>) attributes {dimension_semantics = [#tpu.dimension_semantics<parallel>, #tpu.dimension_semantics<parallel>], iteration_bounds = array<i64: 2, 1>, scalar_prefetch = 0 : i64, scratch_operands = 0 : i64, tpu.core_type = #tpu.core_type<tc>, window_params = [{transform_indices = @transform_0, window_bounds = array<i64: 1, 48, 16>}, {pipeline_mode = #tpu.pipeline_mode<synchronous>, transform_indices = @transform_1, window_bounds = array<i64: 96, 48>}, {pipeline_mode = #tpu.pipeline_mode<synchronous>, transform_indices = @transform_2, window_bounds = array<i64: 96, 3>}, {transform_indices = @transform_3, window_bounds = array<i64: 1, 96, 16>}]} {
    %c0 = arith.constant 0 : index
    %c0_0 = arith.constant 0 : index
    %c0_1 = arith.constant 0 : index
    %0 = vector.load %arg2[%c0, %c0_0, %c0_1] : memref<1x48x16xf32, #tpu.memory_space<vmem>>, vector<1x48x16xf32>
    %1 = vector.shape_cast %0 : vector<1x48x16xf32> to vector<48x16xf32>
    %c0_2 = arith.constant 0 : index
    %c0_3 = arith.constant 0 : index
    %2 = vector.load %arg3[%c0_2, %c0_3] : memref<96x48xf32, #tpu.memory_space<vmem>>, vector<96x48xf32>
    %cst = arith.constant dense<0.000000e+00> : vector<96x16xf32>
    %3 = tpu.matmul %2, %1, %cst {dimension_numbers = #tpu.dot_dimension_numbers<[1], [0], [0], [1], [0, 0, 1, 1], [], []>} : vector<96x48xf32>, vector<48x16xf32>, vector<96x16xf32> -> vector<96x16xf32>
    %c0_4 = arith.constant 0 : index
    %c0_5 = arith.constant 0 : index
    %4 = vector.load %arg4[%c0_4, %c0_5] : memref<96x3xf32, #tpu.memory_space<vmem>>, vector<96x1xf32>
    %c0_6 = arith.constant 0 : index
    %c1 = arith.constant 1 : index
    %5 = vector.load %arg4[%c0_6, %c1] : memref<96x3xf32, #tpu.memory_space<vmem>>, vector<96x1xf32>
    %c0_7 = arith.constant 0 : index
    %c2 = arith.constant 2 : index
    %6 = vector.load %arg4[%c0_7, %c2] : memref<96x3xf32, #tpu.memory_space<vmem>>, vector<96x1xf32>
    %7 = vector.broadcast %4 : vector<96x1xf32> to vector<96x16xf32>
    %8 = arith.addf %3, %7 : vector<96x16xf32>
    %cst_8 = arith.constant dense<0.000000e+00> : vector<16xf32>
    %9 = vector.multi_reduction <add>, %8, %cst_8 [0] : vector<96x16xf32> to vector<16xf32>
    %10 = vector.shape_cast %9 : vector<16xf32> to vector<1x16xf32>
    %cst_9 = arith.constant 9.600000e+01 : f32
    %11 = vector.broadcast %cst_9 : f32 to vector<1x16xf32>
    %12 = arith.divf %10, %11 : vector<1x16xf32>
    %13 = vector.broadcast %12 : vector<1x16xf32> to vector<96x16xf32>
    %14 = arith.subf %8, %13 : vector<96x16xf32>
    %15 = arith.mulf %14, %14 : vector<96x16xf32>
    %cst_10 = arith.constant dense<0.000000e+00> : vector<16xf32>
    %16 = vector.multi_reduction <add>, %15, %cst_10 [0] : vector<96x16xf32> to vector<16xf32>
    %17 = vector.shape_cast %16 : vector<16xf32> to vector<1x16xf32>
    %cst_11 = arith.constant 9.600000e+01 : f32
    %18 = vector.broadcast %cst_11 : f32 to vector<1x16xf32>
    %19 = arith.divf %17, %18 : vector<1x16xf32>
    %cst_12 = arith.constant 9.99999974E-6 : f32
    %20 = vector.broadcast %cst_12 : f32 to vector<1x16xf32>
    %21 = arith.addf %19, %20 : vector<1x16xf32>
    %22 = math.rsqrt %21 : vector<1x16xf32>
    %23 = vector.broadcast %22 : vector<1x16xf32> to vector<96x16xf32>
    %24 = arith.mulf %14, %23 : vector<96x16xf32>
    %25 = vector.broadcast %5 : vector<96x1xf32> to vector<96x16xf32>
    %26 = arith.mulf %24, %25 : vector<96x16xf32>
    %27 = vector.broadcast %6 : vector<96x1xf32> to vector<96x16xf32>
    %28 = arith.addf %26, %27 : vector<96x16xf32>
    %c0_13 = arith.constant 0 : index
    %c0_14 = arith.constant 0 : index
    %c0_15 = arith.constant 0 : index
    %29 = vector.load %arg5[%c0_13, %c0_14, %c0_15] : memref<1x96x16xf32, #tpu.memory_space<vmem>>, vector<1x96x16xf32>
    %30 = vector.shape_cast %29 : vector<1x96x16xf32> to vector<96x16xf32>
    %31 = vector.shape_cast %28 : vector<96x16xf32> to vector<1x96x16xf32>
    tpu.vector_store %arg5[%c0_13, %c0_14, %c0_15], %31 {strides = array<i32>} : memref<1x96x16xf32, #tpu.memory_space<vmem>>, vector<1x96x16xf32>,
    return
  }
  func.func @transform_0(%arg0: i32, %arg1: i32) -> (i32, i32, i32) {
    %c0_i32 = arith.constant 0 : i32
    %c0_i32_0 = arith.constant 0 : i32
    return %arg0, %c0_i32, %arg1 : i32, i32, i32
  }
  func.func @transform_1(%arg0: i32, %arg1: i32) -> (i32, i32) {
    %c0_i32 = arith.constant 0 : i32
    %c0_i32_0 = arith.constant 0 : i32
    %c0_i32_1 = arith.constant 0 : i32
    return %c0_i32, %c0_i32_0 : i32, i32
  }
  func.func @transform_2(%arg0: i32, %arg1: i32) -> (i32, i32) {
    %c0_i32 = arith.constant 0 : i32
    %c0_i32_0 = arith.constant 0 : i32
    %c0_i32_1 = arith.constant 0 : i32
    return %c0_i32, %c0_i32_0 : i32, i32
  }
  func.func @transform_3(%arg0: i32, %arg1: i32) -> (i32, i32, i32) {
    %c0_i32 = arith.constant 0 : i32
    %c0_i32_0 = arith.constant 0 : i32
    return %arg0, %c0_i32, %arg1 : i32, i32, i32
  }
}

</mosaic_0001>

<llo_original>
// kernel: tpu_custom_call.1
$region0: #{tpu_custom_call.1}
  #allocation0 [shape = 'u32[]', space=smem, size = 0x4, offset = 0x4, fixed_abs, tag = 'smem constant byte address 0x4 - core index']
  #allocation1 [shape = 'u32[144,128]{1,0:T(1,128)}', space=vmem, size = 0x12000, scoped, tag = 'internal scratch']
  %s0 = inlined_call_operand.vmem [shape: f32[2,48,16], index: 0, kind: input, shape index: {}]
  %s1 = inlined_call_operand.vmem [shape: f32[96,48], index: 1, kind: input, shape index: {}]
  %s2 = inlined_call_operand.vmem [shape: f32[96,3], index: 2, kind: input, shape index: {}]
  %s3 = inlined_call_operand.vmem [shape: f32[2,96,16], index: 3, kind: output, shape index: {}]
  %s4 = sld [smem:[#allocation0]]
  $region45: #{tpu_custom_call.1} parent=0
    _
  %s6 = ssub.s32 1, %s4
  %s7 = scalar_select 0, %s6, %s4
  loop: start=0, step=1, limit=4
  $region2: #{tpu_custom_call.1} parent=0 // loop_pre_header
    _
  $region3: #{tpu_custom_call.1} parent=0 // loop_header
    %s9 = sphi 0, %s13
    %p10 = scmp.ge.s32.totalorder %s9, 4
    %s16 = sphi 0, %s28
    %s17 = sphi 0, %s24
    %s18 = sphi 0, %s16
    %s19 = sphi 0, %s17
    %s20 = sphi 0, %s18
    %s21 = sphi 0, %s19
    %s33 = sphi 0, %s35
    %s36 = sphi 0, %s33
    %s37 = sphi 0, %s36
    %s53 = sphi 0, %s37
    %s57 = sphi 0, %s57
    %s59 = sphi 0, %s57
    %s60 = sphi 0, %s59
    %s74 = sphi 0, %s60
    %s78 = sphi 0, %s78
    %s80 = sphi 0, %s78
    %s81 = sphi 0, %s80
    %s95 = sphi 0, %s81
    %s103 = sphi 0, %s105
    %s106 = sphi 0, %s103
    %s107 = sphi 0, %s106
    %s123 = sphi 0, %s107
  $region4: #{tpu_custom_call.1} parent=0 // loop_header_branch
    %12 = sbr.rel (%p10) target = $region8
  $region5: #{tpu_custom_call.1} parent=0 // loop_body
    %s14 = ssub.s32 %s9, 1
    %s15 = ssub.s32 %s9, 2
    %s22 = sadd.s32 1, %s17
    %p23 = scmp.ge.s32.totalorder %s22, 1
    %s24 = scalar_select %p23, 0, %s22
    %s25 = sadd.s32 1, %s16
    %s26 = scalar_select %p23, %s25, %s16
    %p27 = scmp.ge.s32.totalorder %s26, 2
    %s28 = scalar_select %p27, 0, %s26
    %s29 = ssub.s32 %s16, %s28
    %s30 = ssub.s32 %s17, %s24
    %s31 = sor.u32 %s29, %s30
    %p32 = scmp.eq.s32.totalorder %s31, 0
    %s34 = sadd.s32 %s33, 1
    %s35 = scalar_select %p32, %s33, %s34
    %p38 = pneg %p32
    %p39 = scmp.eq.s32.totalorder %s9, 1
    %p40 = por %p38, %p39
    %p41 = scmp.ne.s32.totalorder %s33, %s36
    %p42 = scmp.eq.s32.totalorder %s9, 0
    %p43 = por %p41, %p42
    %p44 = scmp.ne.s32.totalorder %s33, %s36
    %p45 = scmp.eq.s32.totalorder %s14, 1
    %p46 = por %p44, %p45
    %p47 = scmp.ne.s32.totalorder %s36, %s37
    %p48 = scmp.eq.s32.totalorder %s14, 0
    %p49 = por %p47, %p48
    %p50 = scmp.ne.s32.totalorder %s36, %s37
    %p51 = scmp.eq.s32.totalorder %s15, 1
    %p52 = por %p50, %p51
    %p54 = scmp.ne.s32.totalorder %s37, %s53
    %p55 = scmp.eq.s32.totalorder %s15, 0
    %p56 = por %p54, %p55
    %s58 = sadd.s32 %s57, 1
    %p61 = scmp.eq.s32.totalorder %s9, 1
    %p62 = scmp.ne.s32.totalorder %s57, %s59
    %p63 = scmp.eq.s32.totalorder %s9, 0
    %p64 = por %p62, %p63
    %p65 = scmp.ne.s32.totalorder %s57, %s59
    %p66 = scmp.eq.s32.totalorder %s14, 1
    %p67 = por %p65, %p66
    %p68 = scmp.ne.s32.totalorder %s59, %s60
    %p69 = scmp.eq.s32.totalorder %s14, 0
    %p70 = por %p68, %p69
    %p71 = scmp.ne.s32.totalorder %s59, %s60
    %p72 = scmp.eq.s32.totalorder %s15, 1
    %p73 = por %p71, %p72
    %p75 = scmp.ne.s32.totalorder %s60, %s74
    %p76 = scmp.eq.s32.totalorder %s15, 0
    %p77 = por %p75, %p76
    %s79 = sadd.s32 %s78, 1
    %p82 = scmp.eq.s32.totalorder %s9, 1
    %p83 = scmp.ne.s32.totalorder %s78, %s80
    %p84 = scmp.eq.s32.totalorder %s9, 0
    %p85 = por %p83, %p84
    %p86 = scmp.ne.s32.totalorder %s78, %s80
    %p87 = scmp.eq.s32.totalorder %s14, 1
    %p88 = por %p86, %p87
    %p89 = scmp.ne.s32.totalorder %s80, %s81
    %p90 = scmp.eq.s32.totalorder %s14, 0
    %p91 = por %p89, %p90
    %p92 = scmp.ne.s32.totalorder %s80, %s81
    %p93 = scmp.eq.s32.totalorder %s15, 1
    %p94 = por %p92, %p93
    %p96 = scmp.ne.s32.totalorder %s81, %s95
    %p97 = scmp.eq.s32.totalorder %s15, 0
    %p98 = por %p96, %p97
    %s99 = ssub.s32 %s16, %s28
    %s100 = ssub.s32 %s17, %s24
    %s101 = sor.u32 %s99, %s100
    %p102 = scmp.eq.s32.totalorder %s101, 0
    %s104 = sadd.s32 %s103, 1
    %s105 = scalar_select %p102, %s103, %s104
    %p108 = pneg %p102
    %p109 = scmp.eq.s32.totalorder %s9, 1
    %p110 = por %p108, %p109
    %p111 = scmp.ne.s32.totalorder %s103, %s106
    %p112 = scmp.eq.s32.totalorder %s9, 0
    %p113 = por %p111, %p112
    %p114 = scmp.ne.s32.totalorder %s103, %s106
    %p115 = scmp.eq.s32.totalorder %s14, 1
    %p116 = por %p114, %p115
    %p117 = scmp.ne.s32.totalorder %s106, %s107
    %p118 = scmp.eq.s32.totalorder %s14, 0
    %p119 = por %p117, %p118
    %p120 = scmp.ne.s32.totalorder %s106, %s107
    %p121 = scmp.eq.s32.totalorder %s15, 1
    %p122 = por %p120, %p121
    %p124 = scmp.ne.s32.totalorder %s107, %s123
    %p125 = scmp.eq.s32.totalorder %s15, 0
    %p126 = por %p124, %p125
    %p127 = scmp.le.s32.totalorder 1, %s9
    %p128 = scmp.lt.s32.totalorder %s9, 3
    %p129 = pnand %p127, %p128
    %p130 = pneg %p129
    // Predicated region
    $region9: #{tpu_custom_call.1} parent=5 // pred_check
      _
    $region10: #{tpu_custom_call.1} parent=5 // pred_check_branch
      %132 = sbr.rel (%p129) target = $region12
    $region11: #{tpu_custom_call.1} parent=5 // pred_region
      %s133 = ssub.s32 %s9, 1
      // Predicated region
      $region13: #{tpu_custom_call.1} parent=11 // pred_check
        %p134 = pneg %p70
      $region14: #{tpu_custom_call.1} parent=11 // pred_check_branch
        %136 = sbr.rel (%p134) target = $region16
      $region15: #{tpu_custom_call.1} parent=11 // pred_region
        _
      $region16: #{tpu_custom_call.1} parent=11 // pred_fallthru
        _
      // Predicated region
      $region17: #{tpu_custom_call.1} parent=11 // pred_check
        %p137 = pneg %p91
      $region18: #{tpu_custom_call.1} parent=11 // pred_check_branch
        %139 = sbr.rel (%p137) target = $region20
      $region19: #{tpu_custom_call.1} parent=11 // pred_region
        _
      $region20: #{tpu_custom_call.1} parent=11 // pred_fallthru
        _
    $region12: #{tpu_custom_call.1} parent=5 // pred_fallthru
      _
    %p140 = scmp.lt.s32.totalorder %s9, 2
    // Predicated region
    $region21: #{tpu_custom_call.1} parent=5 // pred_check
      %p141 = pneg %p140
    $region22: #{tpu_custom_call.1} parent=5 // pred_check_branch
      %143 = sbr.rel (%p141) target = $region24
    $region23: #{tpu_custom_call.1} parent=5 // pred_region
      // Predicated region
      $region25: #{tpu_custom_call.1} parent=23 // pred_check
        %p144 = pneg %p43
      $region26: #{tpu_custom_call.1} parent=23 // pred_check_branch
        %146 = sbr.rel (%p144) target = $region28
      $region27: #{tpu_custom_call.1} parent=23 // pred_region
        %p147 = scmp.lt.s32.totalorder %s16, 1
        %s148 = scalar_select %p147, %s16, 1
        %p149 = scmp.lt.s32.totalorder %s17, 0
        %s150 = scalar_select %p149, %s17, 0
        %s151 = smul.addr %s148, 6
        %s152 = sadd.s32 %s150, %s151
        %s153 = smul.addr %s152, 8
        %s154 = scalar_lea.vmem %s0, %s153
      $region28: #{tpu_custom_call.1} parent=23 // pred_fallthru
        _
    $region24: #{tpu_custom_call.1} parent=5 // pred_fallthru
      _
    %p155 = scmp.le.s32.totalorder 1, %s9
    %p156 = scmp.lt.s32.totalorder %s9, 3
    %p157 = pnand %p155, %p156
    %p158 = pneg %p157
    // Predicated region
    $region29: #{tpu_custom_call.1} parent=5 // pred_check
      _
    $region30: #{tpu_custom_call.1} parent=5 // pred_check_branch
      %160 = sbr.rel (%p157) target = $region32
    $region31: #{tpu_custom_call.1} parent=5 // pred_region
      %s161 = ssub.s32 %s9, 1
      %p162 = scmp.lt.s32.totalorder %s18, 1
      %s163 = scalar_select %p162, %s18, 1
      %p164 = scmp.lt.s32.totalorder %s19, 0
      %s165 = scalar_select %p164, %s19, 0
      %s166 = smul.addr %s163, 6
      %s167 = sadd.s32 %s165, %s166
      %s168 = smul.addr %s167, 8
      %s169 = scalar_lea.vmem %s0, %s168
      %p170 = pneg %p49
      %p171 = pneg %p46
      %p172 = pneg %p70
      %p173 = pneg %p67
      %p174 = pneg %p91
      %p175 = pneg %p88
      %p176 = pneg %p119
      %p177 = pneg %p116
      %p178 = scmp.lt.s32.totalorder %s18, 1
      %s179 = scalar_select %p178, %s18, 1
      %p180 = scmp.lt.s32.totalorder %s19, 0
      %s181 = scalar_select %p180, %s19, 0
      %s182 = smul.addr %s179, 12
      %s183 = sadd.s32 %s181, %s182
      %s184 = smul.addr %s183, 8
      %s185 = scalar_lea.vmem %s3, %s184
      %p186 = scmp.lt.s32.totalorder %s18, 1
      %s187 = scalar_select %p186, %s18, 1
      %p188 = scmp.lt.s32.totalorder %s19, 0
      %s189 = scalar_select %p188, %s19, 0
      %s190 = smul.addr %s187, 6
      %s191 = sadd.s32 %s189, %s190
      %s192 = smul.addr %s191, 8
      %s193 = scalar_lea.vmem %s0, %s192
      %p194 = scmp.lt.s32.totalorder %s18, 1
      %s195 = scalar_select %p194, %s18, 1
      %p196 = scmp.lt.s32.totalorder %s19, 0
      %s197 = scalar_select %p196, %s19, 0
      %s198 = smul.addr %s195, 12
      %s199 = sadd.s32 %s197, %s198
      %s200 = smul.addr %s199, 8
      %s201 = scalar_lea.vmem %s3, %s200
      %v202 = vld [vmem:[%s193] sm:$0xff]
      %v203 = vld [vmem:[%s193 + $0x8] sm:$0xff]
      %v204 = vld [vmem:[%s193 + $0x10] sm:$0xff]
      %v205 = vld [vmem:[%s193 + $0x18] sm:$0xff]
      %v206 = vld [vmem:[%s193 + $0x20] sm:$0xff]
      %v207 = vld [vmem:[%s193 + $0x28] sm:$0xff]
      %v208 = vld [vmem:[%s1] sm:$0xff]
      %v209 = vld [vmem:[%s1 + $0x8] sm:$0xff]
      %v210 = vld [vmem:[%s1 + $0x10] sm:$0xff]
      %v211 = vld [vmem:[%s1 + $0x18] sm:$0xff]
      %v212 = vld [vmem:[%s1 + $0x20] sm:$0xff]
      %v213 = vld [vmem:[%s1 + $0x28] sm:$0xff]
      %v214 = vld [vmem:[%s1 + $0x30] sm:$0xff]
      %v215 = vld [vmem:[%s1 + $0x38] sm:$0xff]
      %v216 = vld [vmem:[%s1 + $0x40] sm:$0xff]
      %v217 = vld [vmem:[%s1 + $0x48] sm:$0xff]
      %v218 = vld [vmem:[%s1 + $0x50] sm:$0xff]
      %v219 = vld [vmem:[%s1 + $0x58] sm:$0xff]
      %v220 = vld [vmem:[%s2] sm:$0xff]
      %v221 = vld [vmem:[%s2 + $0x8] sm:$0xff]
      %v222 = vld [vmem:[%s2 + $0x10] sm:$0xff]
      %v223 = vld [vmem:[%s2 + $0x18] sm:$0xff]
      %v224 = vld [vmem:[%s2 + $0x20] sm:$0xff]
      %v225 = vld [vmem:[%s2 + $0x28] sm:$0xff]
      %v226 = vld [vmem:[%s2 + $0x30] sm:$0xff]
      %v227 = vld [vmem:[%s2 + $0x38] sm:$0xff]
      %v228 = vld [vmem:[%s2 + $0x40] sm:$0xff]
      %v229 = vld [vmem:[%s2 + $0x48] sm:$0xff]
      %v230 = vld [vmem:[%s2 + $0x50] sm:$0xff]
      %v231 = vld [vmem:[%s2 + $0x58] sm:$0xff]
      %233 = vset.pattern.permute.xlu0 0
      %234 = vperm.xlu0 %233, %v220
      %v235 = vpop.permute.xlu0 %234
      %238 = vset.pattern.permute.xlu0 0
      %239 = vperm.xlu0 %238, %v221
      %v240 = vpop.permute.xlu0 %239
      %243 = vset.pattern.permute.xlu0 0
      %244 = vperm.xlu0 %243, %v222
      %v245 = vpop.permute.xlu0 %244
      %248 = vset.pattern.permute.xlu0 0
      %249 = vperm.xlu0 %248, %v223
      %v250 = vpop.permute.xlu0 %249
      %253 = vset.pattern.permute.xlu0 0
      %254 = vperm.xlu0 %253, %v224
      %v255 = vpop.permute.xlu0 %254
      %258 = vset.pattern.permute.xlu0 0
      %259 = vperm.xlu0 %258, %v225
      %v260 = vpop.permute.xlu0 %259
      %263 = vset.pattern.permute.xlu0 0
      %264 = vperm.xlu0 %263, %v226
      %v265 = vpop.permute.xlu0 %264
      %268 = vset.pattern.permute.xlu0 0
      %269 = vperm.xlu0 %268, %v227
      %v270 = vpop.permute.xlu0 %269
      %273 = vset.pattern.permute.xlu0 0
      %274 = vperm.xlu0 %273, %v228
      %v275 = vpop.permute.xlu0 %274
      %278 = vset.pattern.permute.xlu0 0
      %279 = vperm.xlu0 %278, %v229
      %v280 = vpop.permute.xlu0 %279
      %283 = vset.pattern.permute.xlu0 0
      %284 = vperm.xlu0 %283, %v230
      %v285 = vpop.permute.xlu0 %284
      %288 = vset.pattern.permute.xlu0 0
      %289 = vperm.xlu0 %288, %v231
      %v290 = vpop.permute.xlu0 %289
      %vm292 = vcmask 392192
      %v294 = vsel %vm292, %v208, 0
      %v297 = vsel %vm292, %v209, 0
      %v300 = vsel %vm292, %v210, 0
      %v303 = vsel %vm292, %v211, 0
      %v306 = vsel %vm292, %v212, 0
      %v309 = vsel %vm292, %v213, 0
      %v312 = vsel %vm292, %v214, 0
      %v315 = vsel %vm292, %v215, 0
      %v318 = vsel %vm292, %v216, 0
      %v321 = vsel %vm292, %v217, 0
      %v324 = vsel %vm292, %v218, 0
      %v327 = vsel %vm292, %v219, 0
      %329 = vmatprep.subr.mxu0 0.0
      %330 = vmatpush1.msra.mxu0 %v202
      %331 = vmatprep.subr.mxu0 0.0
      %332 = vmatpush1.msra.mxu0 %v203
      %333 = vmatprep.subr.mxu0 0.0
      %334 = vmatpush1.msra.mxu0 %v204
      %335 = vmatprep.subr.mxu0 0.0
      %336 = vmatpush1.msra.mxu0 %v205
      %337 = vmatprep.subr.mxu0 0.0
      %338 = vmatpush1.msra.mxu0 %v206
      %339 = vmatprep.subr.mxu0 0.0
      %340 = vmatpush1.msra.mxu0 %v207
      %341 = vmatprep.subr.mxu0 0.0
      %342 = vmatpush1.msra.mxu0 0.0
      %343 = vmatprep.subr.mxu0 0.0
      %344 = vmatpush1.msra.mxu0 0.0
      %345 = vmatprep.subr.mxu0 0.0
      %346 = vmatpush1.msra.mxu0 0.0
      %347 = vmatprep.subr.mxu0 0.0
      %348 = vmatpush1.msra.mxu0 0.0
      %349 = vmatprep.subr.mxu0 0.0
      %350 = vmatpush1.msra.mxu0 0.0
      %351 = vmatprep.subr.mxu0 0.0
      %352 = vmatpush1.msra.mxu0 0.0
      %353 = vmatprep.subr.mxu0 0.0
      %354 = vmatpush1.msra.mxu0 0.0
      %355 = vmatprep.subr.mxu0 0.0
      %356 = vmatpush1.msra.mxu0 0.0
      %357 = vmatprep.subr.mxu0 0.0
      %358 = vmatpush1.msra.mxu0 0.0
      %359 = vmatprep.subr.mxu0 0.0
      %360 = vmatpush1.msra.mxu0 0.0
      %361 = vmatprep.subr.mxu0 0.0
      %362 = vmatpush1.msra.mxu0 0.0
      %363 = vmatprep.subr.mxu0 0.0
      %364 = vmatpush1.msra.mxu0 0.0
      %365 = vmatprep.subr.mxu0 0.0
      %366 = vmatpush1.msra.mxu0 0.0
      %367 = vmatprep.subr.mxu0 0.0
      %368 = vmatpush1.msra.mxu0 0.0
      %369 = vmatprep.subr.mxu0 0.0
      %370 = vmatpush1.msra.mxu0 0.0
      %371 = vmatprep.subr.mxu0 0.0
      %372 = vmatpush1.msra.mxu0 0.0
      %373 = vmatprep.subr.mxu0 0.0
      %374 = vmatpush1.msra.mxu0 0.0
      %375 = vmatprep.subr.mxu0 0.0
      %376 = vmatpush1.msra.mxu0 0.0
      %377 = vmatprep.subr.mxu0 0.0
      %378 = vmatpush1.msra.mxu0 0.0
      %379 = vmatprep.subr.mxu0 0.0
      %380 = vmatpush1.msra.mxu0 0.0
      %381 = vmatprep.subr.mxu0 0.0
      %382 = vmatpush1.msra.mxu0 0.0
      %383 = vmatprep.subr.mxu0 0.0
      %384 = vmatpush1.msra.mxu0 0.0
      %385 = vmatprep.subr.mxu0 0.0
      %386 = vmatpush1.msra.mxu0 0.0
      %387 = vmatprep.subr.mxu0 0.0
      %388 = vmatpush1.msra.mxu0 0.0
      %389 = vmatprep.subr.mxu0 0.0
      %390 = vmatpush1.msra.mxu0 0.0
      %391 = vmatprep.subr.mxu0 0.0
      %392 = vmatpush1.msra.mxu0 0.0
      %393 = vmatprep.mubr.f32.mxu0 0.0
      %394 = vmatmul.mubr.f32.gmra.mrb[0].mxu0 %v294
      %v395 = vpop.f32.mrb[0].mxu0
      %v396 = vadd.f32 %v235, %v395
      %v397 = vpop.f32.mrb[0].mxu0
      %398 = vmatprep.mubr.f32.mxu0 0.0
      %399 = vmatmul.mubr.f32.gmra.mrb[0].mxu0 %v297
      %v400 = vpop.f32.mrb[0].mxu0
      %v401 = vadd.f32 %v240, %v400
      %v402 = vpop.f32.mrb[0].mxu0
      %403 = vmatprep.mubr.f32.mxu0 0.0
      %404 = vmatmul.mubr.f32.gmra.mrb[0].mxu0 %v300
      %v405 = vpop.f32.mrb[0].mxu0
      %v406 = vadd.f32 %v245, %v405
      %v407 = vpop.f32.mrb[0].mxu0
      %408 = vmatprep.mubr.f32.mxu0 0.0
      %409 = vmatmul.mubr.f32.gmra.mrb[0].mxu0 %v303
      %v410 = vpop.f32.mrb[0].mxu0
      %v411 = vadd.f32 %v250, %v410
      %v412 = vpop.f32.mrb[0].mxu0
      %413 = vmatprep.mubr.f32.mxu0 0.0
      %414 = vmatmul.mubr.f32.gmra.mrb[0].mxu0 %v306
      %v415 = vpop.f32.mrb[0].mxu0
      %v416 = vadd.f32 %v255, %v415
      %v417 = vpop.f32.mrb[0].mxu0
      %418 = vmatprep.mubr.f32.mxu0 0.0
      %419 = vmatmul.mubr.f32.gmra.mrb[0].mxu0 %v309
      %v420 = vpop.f32.mrb[0].mxu0
      %v421 = vadd.f32 %v260, %v420
      %v422 = vpop.f32.mrb[0].mxu0
      %423 = vmatprep.mubr.f32.mxu0 0.0
      %424 = vmatmul.mubr.f32.gmra.mrb[0].mxu0 %v312
      %v425 = vpop.f32.mrb[0].mxu0
      %v426 = vadd.f32 %v265, %v425
      %v427 = vpop.f32.mrb[0].mxu0
      %428 = vmatprep.mubr.f32.mxu0 0.0
      %429 = vmatmul.mubr.f32.gmra.mrb[0].mxu0 %v315
      %v430 = vpop.f32.mrb[0].mxu0
      %v431 = vadd.f32 %v270, %v430
      %v432 = vpop.f32.mrb[0].mxu0
      %433 = vmatprep.mubr.f32.mxu0 0.0
      %434 = vmatmul.mubr.f32.gmra.mrb[0].mxu0 %v318
      %v435 = vpop.f32.mrb[0].mxu0
      %v436 = vadd.f32 %v275, %v435
      %v437 = vpop.f32.mrb[0].mxu0
      %438 = vmatprep.mubr.f32.mxu0 0.0
      %439 = vmatmul.mubr.f32.gmra.mrb[0].mxu0 %v321
      %v440 = vpop.f32.mrb[0].mxu0
      %v441 = vadd.f32 %v280, %v440
      %v442 = vpop.f32.mrb[0].mxu0
      %443 = vmatprep.mubr.f32.mxu0 0.0
      %444 = vmatmul.mubr.f32.gmra.mrb[0].mxu0 %v324
      %v445 = vpop.f32.mrb[0].mxu0
      %v446 = vadd.f32 %v285, %v445
      %v447 = vpop.f32.mrb[0].mxu0
      %448 = vmatprep.mubr.f32.mxu0 0.0
      %449 = vmatmul.mubr.f32.gmra.mrb[0].mxu0 %v327
      %v450 = vpop.f32.mrb[0].mxu0
      %v451 = vadd.f32 %v290, %v450
      %v452 = vpop.f32.mrb[0].mxu0
      %453 = vdwg.mxu0
      %vm454 = vcmask 130048
      %v455 = vsel %vm454, %v396, 0.0
      %v456 = vsel %vm454, %v401, 0.0
      %v457 = vadd.f32 %v455, %v456
      %v458 = vsel %vm454, %v406, 0.0
      %v459 = vadd.f32 %v457, %v458
      %v460 = vsel %vm454, %v411, 0.0
      %v461 = vadd.f32 %v459, %v460
      %v462 = vsel %vm454, %v416, 0.0
      %v463 = vadd.f32 %v461, %v462
      %v464 = vsel %vm454, %v421, 0.0
      %v465 = vadd.f32 %v463, %v464
      %v466 = vsel %vm454, %v426, 0.0
      %v467 = vadd.f32 %v465, %v466
      %v468 = vsel %vm454, %v431, 0.0
      %v469 = vadd.f32 %v467, %v468
      %v470 = vsel %vm454, %v436, 0.0
      %v471 = vadd.f32 %v469, %v470
      %v472 = vsel %vm454, %v441, 0.0
      %v473 = vadd.f32 %v471, %v472
      %v474 = vsel %vm454, %v446, 0.0
      %v475 = vadd.f32 %v473, %v474
      %v476 = vsel %vm454, %v451, 0.0
      %v477 = vadd.f32 %v475, %v476
      %v478 = vrot.slane %v477, 4
      %v479 = vadd.f32 %v477, %v478
      %v480 = vrot.slane %v479, 2
      %v481 = vadd.f32 %v479, %v480
      %v482 = vrot.slane %v481, 1
      %v483 = vadd.f32 %v481, %v482
      %v484 = vrcp.pop 96.0
      %v485 = vmul.f32 %v483, %v484
      %v486 = vsub.f32 %v396, %v485
      %v487 = vsub.f32 %v401, %v485
      %v488 = vsub.f32 %v406, %v485
      %v489 = vsub.f32 %v411, %v485
      %v490 = vsub.f32 %v416, %v485
      %v491 = vsub.f32 %v421, %v485
      %v492 = vsub.f32 %v426, %v485
      %v493 = vsub.f32 %v431, %v485
      %v494 = vsub.f32 %v436, %v485
      %v495 = vsub.f32 %v441, %v485
      %v496 = vsub.f32 %v446, %v485
      %v497 = vsub.f32 %v451, %v485
      %v498 = vmul.f32 %v486, %v486
      %v499 = vmul.f32 %v487, %v487
      %v500 = vmul.f32 %v488, %v488
      %v501 = vmul.f32 %v489, %v489
      %v502 = vmul.f32 %v490, %v490
      %v503 = vmul.f32 %v491, %v491
      %v504 = vmul.f32 %v492, %v492
      %v505 = vmul.f32 %v493, %v493
      %v506 = vmul.f32 %v494, %v494
      %v507 = vmul.f32 %v495, %v495
      %v508 = vmul.f32 %v496, %v496
      %v509 = vmul.f32 %v497, %v497
      %v510 = vsel %vm454, %v498, 0.0
      %v511 = vsel %vm454, %v499, 0.0
      %v512 = vadd.f32 %v510, %v511
      %v513 = vsel %vm454, %v500, 0.0
      %v514 = vadd.f32 %v512, %v513
      %v515 = vsel %vm454, %v501, 0.0
      %v516 = vadd.f32 %v514, %v515
      %v517 = vsel %vm454, %v502, 0.0
      %v518 = vadd.f32 %v516, %v517
      %v519 = vsel %vm454, %v503, 0.0
      %v520 = vadd.f32 %v518, %v519
      %v521 = vsel %vm454, %v504, 0.0
      %v522 = vadd.f32 %v520, %v521
      %v523 = vsel %vm454, %v505, 0.0
      %v524 = vadd.f32 %v522, %v523
      %v525 = vsel %vm454, %v506, 0.0
      %v526 = vadd.f32 %v524, %v525
      %v527 = vsel %vm454, %v507, 0.0
      %v528 = vadd.f32 %v526, %v527
      %v529 = vsel %vm454, %v508, 0.0
      %v530 = vadd.f32 %v528, %v529
      %v531 = vsel %vm454, %v509, 0.0
      %v532 = vadd.f32 %v530, %v531
      %v533 = vrot.slane %v532, 4
      %v534 = vadd.f32 %v532, %v533
      %v535 = vrot.slane %v534, 2
      %v536 = vadd.f32 %v534, %v535
      %v537 = vrot.slane %v536, 1
      %v538 = vadd.f32 %v536, %v537
      %v539 = vmul.f32 %v538, %v484
      %v540 = vadd.f32 %v539, 1e-05
      %v541 = vrsqrt.pop %v540
      %v542 = vmul.f32 %v486, %v541
      %v543 = vmul.f32 %v487, %v541
      %v544 = vmul.f32 %v488, %v541
      %v545 = vmul.f32 %v489, %v541
      %v546 = vmul.f32 %v490, %v541
      %v547 = vmul.f32 %v491, %v541
      %v548 = vmul.f32 %v492, %v541
      %v549 = vmul.f32 %v493, %v541
      %v550 = vmul.f32 %v494, %v541
      %v551 = vmul.f32 %v495, %v541
      %v552 = vmul.f32 %v496, %v541
      %v553 = vmul.f32 %v497, %v541
      %554 = vset.pattern.permute.xlu0 1
      %555 = vperm.xlu0 %554, %v220
      %v556 = vpop.permute.xlu0 %555
      %558 = vset.pattern.permute.xlu0 1
      %559 = vperm.xlu0 %558, %v221
      %v560 = vpop.permute.xlu0 %559
      %562 = vset.pattern.permute.xlu0 1
      %563 = vperm.xlu0 %562, %v222
      %v564 = vpop.permute.xlu0 %563
      %566 = vset.pattern.permute.xlu0 1
      %567 = vperm.xlu0 %566, %v223
      %v568 = vpop.permute.xlu0 %567
      %570 = vset.pattern.permute.xlu0 1
      %571 = vperm.xlu0 %570, %v224
      %v572 = vpop.permute.xlu0 %571
      %574 = vset.pattern.permute.xlu0 1
      %575 = vperm.xlu0 %574, %v225
      %v576 = vpop.permute.xlu0 %575
      %578 = vset.pattern.permute.xlu0 1
      %579 = vperm.xlu0 %578, %v226
      %v580 = vpop.permute.xlu0 %579
      %582 = vset.pattern.permute.xlu0 1
      %583 = vperm.xlu0 %582, %v227
      %v584 = vpop.permute.xlu0 %583
      %586 = vset.pattern.permute.xlu0 1
      %587 = vperm.xlu0 %586, %v228
      %v588 = vpop.permute.xlu0 %587
      %590 = vset.pattern.permute.xlu0 1
      %591 = vperm.xlu0 %590, %v229
      %v592 = vpop.permute.xlu0 %591
      %594 = vset.pattern.permute.xlu0 1
      %595 = vperm.xlu0 %594, %v230
      %v596 = vpop.permute.xlu0 %595
      %598 = vset.pattern.permute.xlu0 1
      %599 = vperm.xlu0 %598, %v231
      %v600 = vpop.permute.xlu0 %599
      %v602 = vmul.f32 %v542, %v556
      %v603 = vmul.f32 %v543, %v560
      %v604 = vmul.f32 %v544, %v564
      %v605 = vmul.f32 %v545, %v568
      %v606 = vmul.f32 %v546, %v572
      %v607 = vmul.f32 %v547, %v576
      %v608 = vmul.f32 %v548, %v580
      %v609 = vmul.f32 %v549, %v584
      %v610 = vmul.f32 %v550, %v588
      %v611 = vmul.f32 %v551, %v592
      %v612 = vmul.f32 %v552, %v596
      %v613 = vmul.f32 %v553, %v600
      %614 = vset.pattern.permute.xlu0 2
      %615 = vperm.xlu0 %614, %v220
      %v616 = vpop.permute.xlu0 %615
      %618 = vset.pattern.permute.xlu0 2
      %619 = vperm.xlu0 %618, %v221
      %v620 = vpop.permute.xlu0 %619
      %622 = vset.pattern.permute.xlu0 2
      %623 = vperm.xlu0 %622, %v222
      %v624 = vpop.permute.xlu0 %623
      %626 = vset.pattern.permute.xlu0 2
      %627 = vperm.xlu0 %626, %v223
      %v628 = vpop.permute.xlu0 %627
      %630 = vset.pattern.permute.xlu0 2
      %631 = vperm.xlu0 %630, %v224
      %v632 = vpop.permute.xlu0 %631
      %634 = vset.pattern.permute.xlu0 2
      %635 = vperm.xlu0 %634, %v225
      %v636 = vpop.permute.xlu0 %635
      %638 = vset.pattern.permute.xlu0 2
      %639 = vperm.xlu0 %638, %v226
      %v640 = vpop.permute.xlu0 %639
      %642 = vset.pattern.permute.xlu0 2
      %643 = vperm.xlu0 %642, %v227
      %v644 = vpop.permute.xlu0 %643
      %646 = vset.pattern.permute.xlu0 2
      %647 = vperm.xlu0 %646, %v228
      %v648 = vpop.permute.xlu0 %647
      %650 = vset.pattern.permute.xlu0 2
      %651 = vperm.xlu0 %650, %v229
      %v652 = vpop.permute.xlu0 %651
      %654 = vset.pattern.permute.xlu0 2
      %655 = vperm.xlu0 %654, %v230
      %v656 = vpop.permute.xlu0 %655
      %658 = vset.pattern.permute.xlu0 2
      %659 = vperm.xlu0 %658, %v231
      %v660 = vpop.permute.xlu0 %659
      %v662 = vadd.f32 %v602, %v616
      %v663 = vadd.f32 %v603, %v620
      %v664 = vadd.f32 %v604, %v624
      %v665 = vadd.f32 %v605, %v628
      %v666 = vadd.f32 %v606, %v632
      %v667 = vadd.f32 %v607, %v636
      %v668 = vadd.f32 %v608, %v640
      %v669 = vadd.f32 %v609, %v644
      %v670 = vadd.f32 %v610, %v648
      %v671 = vadd.f32 %v611, %v652
      %v672 = vadd.f32 %v612, %v656
      %v673 = vadd.f32 %v613, %v660
      %674 = vst.msk [vmem:[%s201] sm:$0xff] %vm454, %v662
      %675 = vst.msk [vmem:[%s201 + $0x8] sm:$0xff] %vm454, %v663
      %676 = vst.msk [vmem:[%s201 + $0x10] sm:$0xff] %vm454, %v664
      %677 = vst.msk [vmem:[%s201 + $0x18] sm:$0xff] %vm454, %v665
      %678 = vst.msk [vmem:[%s201 + $0x20] sm:$0xff] %vm454, %v666
      %679 = vst.msk [vmem:[%s201 + $0x28] sm:$0xff] %vm454, %v667
      %680 = vst.msk [vmem:[%s201 + $0x30] sm:$0xff] %vm454, %v668
      %681 = vst.msk [vmem:[%s201 + $0x38] sm:$0xff] %vm454, %v669
      %682 = vst.msk [vmem:[%s201 + $0x40] sm:$0xff] %vm454, %v670
      %683 = vst.msk [vmem:[%s201 + $0x48] sm:$0xff] %vm454, %v671
      %684 = vst.msk [vmem:[%s201 + $0x50] sm:$0xff] %vm454, %v672
      %685 = vst.msk [vmem:[%s201 + $0x58] sm:$0xff] %vm454, %v673
      %p686 = scmp.lt.s32.totalorder %s18, 1
      %s687 = scalar_select %p686, %s18, 1
      %p688 = scmp.lt.s32.totalorder %s19, 0
      %s689 = scalar_select %p688, %s19, 0
      %s690 = smul.addr %s687, 12
      %s691 = sadd.s32 %s689, %s690
      %s692 = smul.addr %s691, 8
      %s693 = scalar_lea.vmem %s3, %s692
      // Predicated region
      $region33: #{tpu_custom_call.1} parent=31 // pred_check
        %p694 = pneg %p116
      $region34: #{tpu_custom_call.1} parent=31 // pred_check_branch
        %696 = sbr.rel (%p694) target = $region36
      $region35: #{tpu_custom_call.1} parent=31 // pred_region
        _
      $region36: #{tpu_custom_call.1} parent=31 // pred_fallthru
        _
    $region32: #{tpu_custom_call.1} parent=5 // pred_fallthru
      _
    %p697 = scmp.le.s32.totalorder 2, %s9
    // Predicated region
    $region37: #{tpu_custom_call.1} parent=5 // pred_check
      %p698 = pneg %p697
    $region38: #{tpu_custom_call.1} parent=5 // pred_check_branch
      %700 = sbr.rel (%p698) target = $region40
    $region39: #{tpu_custom_call.1} parent=5 // pred_region
      %s701 = ssub.s32 %s9, 2
      // Predicated region
      $region41: #{tpu_custom_call.1} parent=39 // pred_check
        %p702 = pneg %p122
      $region42: #{tpu_custom_call.1} parent=39 // pred_check_branch
        %704 = sbr.rel (%p702) target = $region44
      $region43: #{tpu_custom_call.1} parent=39 // pred_region
        %p705 = scmp.lt.s32.totalorder %s20, 1
        %s706 = scalar_select %p705, %s20, 1
        %p707 = scmp.lt.s32.totalorder %s21, 0
        %s708 = scalar_select %p707, %s21, 0
        %s709 = smul.addr %s706, 12
        %s710 = sadd.s32 %s708, %s709
        %s711 = smul.addr %s710, 8
        %s712 = scalar_lea.vmem %s3, %s711
      $region44: #{tpu_custom_call.1} parent=39 // pred_fallthru
        _
    $region40: #{tpu_custom_call.1} parent=5 // pred_fallthru
      _
  $region6: #{tpu_custom_call.1} parent=0 // loop_footer
    %s13 = sadd.s32 1, %s9
  $region7: #{tpu_custom_call.1} parent=0 // loop_footer_branch
    %8 = sbr.rel target = $region3
  $region8: #{tpu_custom_call.1} parent=0 // loop_exit
    _

</llo_original>
